<compile_context>
chip_gen: v7x
topology: tpu7x:2x2x1
jax: 0.10.0
libtpu: 0.0.40
codegen_flags: <defaults>
</compile_context>

<pallas_src>
import functools

import jax
import jax.numpy as jnp
from jax.experimental import pallas as pl
from jax.experimental.pallas import tpu as pltpu


# ---------------------------------------------------------------------------
# Kernel
# ---------------------------------------------------------------------------
def _controlled_subspace_kernel(ms_ref, mr_ref, mi_ref, out_ref,
                                acc_r_ref, acc_i_ref, *, b_pad):
    """One (n, k) tile of the control=1 subspace complex matmul.

    ms_ref : (2*b_pad, tk)  stacked [real; imag] state planes (matmul dtype)
    mr_ref : (tk, tn)       real part of the subspace matrix tile
    mi_ref : (tk, tn)       imag part of the subspace matrix tile
    out_ref: (2*b_pad, tn)  stacked [real; imag] transformed planes (f32)
    acc_*  : (2*b_pad, tn)  f32 accumulators, resident across the K axis
    """
    k = pl.program_id(1)

    @pl.when(k == 0)
    def _init():
        acc_r_ref[...] = jnp.zeros_like(acc_r_ref)
        acc_i_ref[...] = jnp.zeros_like(acc_i_ref)

    ms = ms_ref[...]  # reuse each loaded RHS for all 2*b_pad rows
    acc_r_ref[...] += jnp.dot(ms, mr_ref[...], preferred_element_type=jnp.float32)
    acc_i_ref[...] += jnp.dot(ms, mi_ref[...], preferred_element_type=jnp.float32)

    @pl.when(k == pl.num_programs(1) - 1)
    def _finalize():
        rr = acc_r_ref[:b_pad, :]   # sr @ Mr
        ir = acc_r_ref[b_pad:, :]   # si @ Mr
        ri = acc_i_ref[:b_pad, :]   # sr @ Mi
        ii = acc_i_ref[b_pad:, :]   # si @ Mi
        out_ref[:b_pad, :] = rr - ii    # real part of (sr + i*si) @ (Mr + i*Mi)
        out_ref[b_pad:, :] = ri + ir    # imag part


# ---------------------------------------------------------------------------
# Wrapper
# ---------------------------------------------------------------------------
def _ceil_to(x, m):
    return ((x + m - 1) // m) * m


def _pick_tile(d, cap=512):
    # d is a multiple of 128; pick the biggest tile <= cap that divides d.
    for t in (cap, 256, 128):
        if t <= d and d % t == 0:
            return t
    return d


def built_controlled_forward(state, target_matrix, *, control, num_qubits,
                             matmul_dtype=jnp.bfloat16):
    """Pallas-backed forward of BuiltControlled.

    state:         complex64, shape (D,) or (B, D) with D = 2**num_qubits
    target_matrix: complex64, shape (D, D)
    matmul_dtype:  dtype fed to the MXU (bf16 default; use jnp.float32 for
                   full precision). Accumulation is always f32.
    """
    dim = 2 ** num_qubits
    c2 = num_qubits - control - 1
    mask = 1 << c2

    state = jnp.asarray(state)
    target_matrix = jnp.asarray(target_matrix)

    single = state.ndim == 1
    if single:
        state = state[None, :]
    B, D = state.shape
    assert D == dim and target_matrix.shape == (dim, dim)

    outer = D // (2 * mask)
    half = D // 2

    # --- restrict to the control=1 subspace (pure layout work, done by XLA) ---
    st4 = state.reshape(B, outer, 2, mask)
    sub = st4[:, :, 1, :].reshape(B, half)                      # (B, D/2)

    m6 = target_matrix.reshape(outer, 2, mask, outer, 2, mask)
    m_sub = m6[:, 1, :, :, 1, :].reshape(half, half)            # (D/2, D/2)

    sr = jnp.real(sub).astype(matmul_dtype)
    si = jnp.imag(sub).astype(matmul_dtype)
    mr = jnp.real(m_sub).astype(matmul_dtype)
    mi = jnp.imag(m_sub).astype(matmul_dtype)

    # --- pad to lane (128) / sublane (8) multiples -> lane-dense, full MXU tiles
    b_pad = max(8, _ceil_to(B, 8))
    d_pad = max(128, _ceil_to(half, 128))
    two_bp = 2 * b_pad

    sr_p = jnp.zeros((b_pad, d_pad), matmul_dtype).at[:B, :half].set(sr)
    si_p = jnp.zeros((b_pad, d_pad), matmul_dtype).at[:B, :half].set(si)
    ms = jnp.concatenate([sr_p, si_p], axis=0)                  # (2*b_pad, d_pad)

    mr_p = jnp.zeros((d_pad, d_pad), matmul_dtype).at[:half, :half].set(mr)
    mi_p = jnp.zeros((d_pad, d_pad), matmul_dtype).at[:half, :half].set(mi)

    tk = _pick_tile(d_pad)
    tn = _pick_tile(d_pad)
    n_tiles = d_pad // tn
    k_tiles = d_pad // tk

    kernel = functools.partial(_controlled_subspace_kernel, b_pad=b_pad)

    itemsize = jnp.dtype(matmul_dtype).itemsize
    cost = pl.CostEstimate(
        flops=4 * two_bp * d_pad * d_pad,        # two dots of (2Bp, D/2) @ (D/2, D/2)
        transcendentals=0,
        bytes_accessed=itemsize * (2 * d_pad * d_pad + two_bp * d_pad)
        + 4 * two_bp * d_pad,
    )

    out = pl.pallas_call(
        kernel,
        out_shape=jax.ShapeDtypeStruct((two_bp, d_pad), jnp.float32),
        grid_spec=pltpu.PrefetchScalarGridSpec(
            num_scalar_prefetch=0,
            grid=(n_tiles, k_tiles),                      # K (reduction) last
            in_specs=[
                pl.BlockSpec((two_bp, tk), lambda n, k: (0, k)),   # stacked planes
                pl.BlockSpec((tk, tn), lambda n, k: (k, n)),       # Mr tile
                pl.BlockSpec((tk, tn), lambda n, k: (k, n)),       # Mi tile
            ],
            out_specs=pl.BlockSpec((two_bp, tn), lambda n, k: (0, n)),
            scratch_shapes=[pltpu.VMEM((two_bp, tn), jnp.float32),
                            pltpu.VMEM((two_bp, tn), jnp.float32)],
        ),
        compiler_params=pltpu.CompilerParams(
            dimension_semantics=("parallel", "arbitrary")),
        cost_estimate=cost,
    )(ms, mr_p, mi_p)

    tr = out[:B, :half]
    ti = out[b_pad:b_pad + B, :half]
    transformed = (tr + 1j * ti).astype(state.dtype)

    # --- scatter back into the control=1 columns; control=0 columns pass through
    result = st4.at[:, :, 1, :].set(transformed.reshape(B, outer, mask)).reshape(B, D)
    if single:
        result = result[0]
    return result


# ---------------------------------------------------------------------------
# Pure-JAX reference (mirror of the PyTorch forward) and test helpers
# ---------------------------------------------------------------------------
def _reference_forward(state, target_matrix, *, control, num_qubits):
    dim = 2 ** num_qubits
    c2 = num_qubits - control - 1
    mask = 1 << c2
    indices = jnp.arange(dim)
    c1_mask = (indices & mask) != 0
    single = state.ndim == 1
    if single:
        state = state[None, :]
    state_c1 = jnp.where(c1_mask[None, :], state, 0)
    transformed_c1 = jnp.squeeze(state_c1[:, None, :] @ target_matrix, 1)
    out = jnp.where(c1_mask[None, :], transformed_c1, state)
    if single:
        out = out[0]
    return out


def _build_target_matrix(num_qubits, target_qubit, theta):
    """Deterministic full-space matrix for an RX(theta) gate on `target_qubit`."""
    ct = jnp.cos(theta / 2).astype(jnp.complex64)
    st = (-1j * jnp.sin(theta / 2)).astype(jnp.complex64)
    rx = jnp.array([[ct, st], [st, ct]], dtype=jnp.complex64)
    eye2 = jnp.eye(2, dtype=jnp.complex64)
    m = jnp.array([[1.0 + 0j]], dtype=jnp.complex64)
    for q in range(num_qubits):
        m = jnp.kron(m, rx if q == target_qubit else eye2)
    return m  # (2**n, 2**n)


if __name__ == "__main__":
    def run_case(num_qubits, control, target_qubit, batch, matmul_dtype, tol):
        dim = 2 ** num_qubits
        key = jax.random.PRNGKey(0)
        kr, ki = jax.random.split(key)
        shape = (batch, dim) if batch is not None else (dim,)
        state = (jax.random.normal(kr, shape, dtype=jnp.float32)
                 + 1j * jax.random.normal(ki, shape, dtype=jnp.float32)
                 ).astype(jnp.complex64)
        state = state / jnp.linalg.norm(state, axis=-1, keepdims=True)
        tm = _build_target_matrix(num_qubits, target_qubit, theta=0.5)

        out = built_controlled_forward(state, tm, control=control,
                                       num_qubits=num_qubits,
                                       matmul_dtype=matmul_dtype)
        out = jax.block_until_ready(out)
        ref = _reference_forward(state, tm, control=control, num_qubits=num_qubits)
        assert out.shape == ref.shape and out.dtype == jnp.complex64
        err = float(jnp.max(jnp.abs(out - ref)))
        assert jnp.allclose(out, ref, atol=tol, rtol=tol), (
            f"mismatch: nq={num_qubits} dtype={matmul_dtype} max_abs_err={err}")

    # Lane-aligned subspace (D/2 = 128), fast bf16 matmul path.
    run_case(8, control=2, target_qubit=4, batch=8,
             matmul_dtype=jnp.bfloat16, tol=2e-2)
    # Same case at full f32 precision (tight tolerance).
    run_case(8, control=2, target_qubit=4, batch=8,
             matmul_dtype=jnp.float32, tol=1e-4)
    # Unbatched 1-D state path (torch squeeze/unsqueeze convention).
    run_case(7, control=0, target_qubit=3, batch=None,
             matmul_dtype=jnp.float32, tol=1e-4)
    # Small, unaligned case exercising padding (D/2 = 32, B = 3).
    run_case(6, control=5, target_qubit=1, batch=3,
             matmul_dtype=jnp.float32, tol=1e-4)

    print("KERNEL_OK")
</pallas_src>

<mosaic_0001>
module attributes {stable_mosaic.version = 11 : i64} {
  func.func @_controlled_subspace_kernel(%arg0: i32, %arg1: i32, %arg2: memref<16x128xbf16, #tpu.memory_space<vmem>>, %arg3: memref<128x128xbf16, #tpu.memory_space<vmem>>, %arg4: memref<128x128xbf16, #tpu.memory_space<vmem>>, %arg5: memref<16x128xf32, #tpu.memory_space<vmem>>, %arg6: memref<16x128xf32, #tpu.memory_space<vmem>>, %arg7: memref<16x128xf32, #tpu.memory_space<vmem>>) attributes {dimension_semantics = [#tpu.dimension_semantics<parallel>, #tpu.dimension_semantics<arbitrary>], iteration_bounds = array<i64: 1, 1>, scalar_prefetch = 0 : i64, scratch_operands = 2 : i64, tpu.core_type = #tpu.core_type<tc>, window_params = [{transform_indices = @transform_0, window_bounds = array<i64: 16, 128>}, {transform_indices = @transform_1, window_bounds = array<i64: 128, 128>}, {transform_indices = @transform_2, window_bounds = array<i64: 128, 128>}, {transform_indices = @transform_3, window_bounds = array<i64: 16, 128>}]} {
    %c0_i32 = arith.constant 0 : i32
    %0 = arith.cmpi eq, %arg1, %c0_i32 : i32
    %1 = arith.extui %0 : i1 to i32
    %c0_i32_0 = arith.constant 0 : i32
    %2 = arith.cmpi ne, %1, %c0_i32_0 : i32
    scf.if %2 {
      %cst_17 = arith.constant 0.000000e+00 : f32
      %17 = vector.broadcast %cst_17 : f32 to vector<16x128xf32>
      %c0_18 = arith.constant 0 : index
      %c0_19 = arith.constant 0 : index
      %18 = vector.load %arg6[%c0_18, %c0_19] : memref<16x128xf32, #tpu.memory_space<vmem>>, vector<16x128xf32>
      tpu.vector_store %arg6[%c0_18, %c0_19], %17 {strides = array<i32>} : memref<16x128xf32, #tpu.memory_space<vmem>>, vector<16x128xf32>,
      %cst_20 = arith.constant 0.000000e+00 : f32
      %19 = vector.broadcast %cst_20 : f32 to vector<16x128xf32>
      %c0_21 = arith.constant 0 : index
      %c0_22 = arith.constant 0 : index
      %20 = vector.load %arg7[%c0_21, %c0_22] : memref<16x128xf32, #tpu.memory_space<vmem>>, vector<16x128xf32>
      tpu.vector_store %arg7[%c0_21, %c0_22], %19 {strides = array<i32>} : memref<16x128xf32, #tpu.memory_space<vmem>>, vector<16x128xf32>,
    } else {
    }
    %c0 = arith.constant 0 : index
    %c0_1 = arith.constant 0 : index
    %3 = vector.load %arg2[%c0, %c0_1] : memref<16x128xbf16, #tpu.memory_space<vmem>>, vector<16x128xbf16>
    %c0_2 = arith.constant 0 : index
    %c0_3 = arith.constant 0 : index
    %4 = vector.load %arg6[%c0_2, %c0_3] : memref<16x128xf32, #tpu.memory_space<vmem>>, vector<16x128xf32>
    %c0_4 = arith.constant 0 : index
    %c0_5 = arith.constant 0 : index
    %5 = vector.load %arg3[%c0_4, %c0_5] : memref<128x128xbf16, #tpu.memory_space<vmem>>, vector<128x128xbf16>
    %cst = arith.constant dense<0.000000e+00> : vector<16x128xf32>
    %6 = tpu.matmul %3, %5, %cst {dimension_numbers = #tpu.dot_dimension_numbers<[1], [0], [0], [1], [0, 0, 1, 1], [], []>} : vector<16x128xbf16>, vector<128x128xbf16>, vector<16x128xf32> -> vector<16x128xf32>
    %7 = arith.addf %4, %6 : vector<16x128xf32>
    %c0_6 = arith.constant 0 : index
    %c0_7 = arith.constant 0 : index
    %8 = vector.load %arg6[%c0_6, %c0_7] : memref<16x128xf32, #tpu.memory_space<vmem>>, vector<16x128xf32>
    tpu.vector_store %arg6[%c0_6, %c0_7], %7 {strides = array<i32>} : memref<16x128xf32, #tpu.memory_space<vmem>>, vector<16x128xf32>,
    %c0_8 = arith.constant 0 : index
    %c0_9 = arith.constant 0 : index
    %9 = vector.load %arg7[%c0_8, %c0_9] : memref<16x128xf32, #tpu.memory_space<vmem>>, vector<16x128xf32>
    %c0_10 = arith.constant 0 : index
    %c0_11 = arith.constant 0 : index
    %10 = vector.load %arg4[%c0_10, %c0_11] : memref<128x128xbf16, #tpu.memory_space<vmem>>, vector<128x128xbf16>
    %cst_12 = arith.constant dense<0.000000e+00> : vector<16x128xf32>
    %11 = tpu.matmul %3, %10, %cst_12 {dimension_numbers = #tpu.dot_dimension_numbers<[1], [0], [0], [1], [0, 0, 1, 1], [], []>} : vector<16x128xbf16>, vector<128x128xbf16>, vector<16x128xf32> -> vector<16x128xf32>
    %12 = arith.addf %9, %11 : vector<16x128xf32>
    %c0_13 = arith.constant 0 : index
    %c0_14 = arith.constant 0 : index
    %13 = vector.load %arg7[%c0_13, %c0_14] : memref<16x128xf32, #tpu.memory_space<vmem>>, vector<16x128xf32>
    tpu.vector_store %arg7[%c0_13, %c0_14], %12 {strides = array<i32>} : memref<16x128xf32, #tpu.memory_space<vmem>>, vector<16x128xf32>,
    %c0_i32_15 = arith.constant 0 : i32
    %14 = arith.cmpi eq, %arg1, %c0_i32_15 : i32
    %15 = arith.extui %14 : i1 to i32
    %c0_i32_16 = arith.constant 0 : i32
    %16 = arith.cmpi ne, %15, %c0_i32_16 : i32
    scf.if %16 {
      %c0_17 = arith.constant 0 : index
      %c0_18 = arith.constant 0 : index
      %17 = vector.load %arg6[%c0_17, %c0_18] : memref<16x128xf32, #tpu.memory_space<vmem>>, vector<8x128xf32>
      %c8 = arith.constant 8 : index
      %c0_19 = arith.constant 0 : index
      %18 = vector.load %arg6[%c8, %c0_19] : memref<16x128xf32, #tpu.memory_space<vmem>>, vector<8x128xf32>
      %c0_20 = arith.constant 0 : index
      %c0_21 = arith.constant 0 : index
      %19 = vector.load %arg7[%c0_20, %c0_21] : memref<16x128xf32, #tpu.memory_space<vmem>>, vector<8x128xf32>
      %c8_22 = arith.constant 8 : index
      %c0_23 = arith.constant 0 : index
      %20 = vector.load %arg7[%c8_22, %c0_23] : memref<16x128xf32, #tpu.memory_space<vmem>>, vector<8x128xf32>
      %21 = arith.subf %17, %20 : vector<8x128xf32>
      %c0_24 = arith.constant 0 : index
      %c0_25 = arith.constant 0 : index
      %22 = vector.load %arg5[%c0_24, %c0_25] : memref<16x128xf32, #tpu.memory_space<vmem>>, vector<8x128xf32>
      tpu.vector_store %arg5[%c0_24, %c0_25], %21 {strides = array<i32>} : memref<16x128xf32, #tpu.memory_space<vmem>>, vector<8x128xf32>,
      %23 = arith.addf %19, %18 : vector<8x128xf32>
      %c8_26 = arith.constant 8 : index
      %c0_27 = arith.constant 0 : index
      %24 = vector.load %arg5[%c8_26, %c0_27] : memref<16x128xf32, #tpu.memory_space<vmem>>, vector<8x128xf32>
      tpu.vector_store %arg5[%c8_26, %c0_27], %23 {strides = array<i32>} : memref<16x128xf32, #tpu.memory_space<vmem>>, vector<8x128xf32>,
    } else {
    }
    return
  }
  func.func @transform_0(%arg0: i32, %arg1: i32) -> (i32, i32) {
    %c0_i32 = arith.constant 0 : i32
    %c0_i32_0 = arith.constant 0 : i32
    return %c0_i32, %arg1 : i32, i32
  }
  func.func @transform_1(%arg0: i32, %arg1: i32) -> (i32, i32) {
    %c0_i32 = arith.constant 0 : i32
    return %arg1, %arg0 : i32, i32
  }
  func.func @transform_2(%arg0: i32, %arg1: i32) -> (i32, i32) {
    %c0_i32 = arith.constant 0 : i32
    return %arg1, %arg0 : i32, i32
  }
  func.func @transform_3(%arg0: i32, %arg1: i32) -> (i32, i32) {
    %c0_i32 = arith.constant 0 : i32
    %c0_i32_0 = arith.constant 0 : i32
    return %c0_i32, %arg0 : i32, i32
  }
}

</mosaic_0001>

<llo_original>
// kernel: tpu_custom_call.1
$region0: #{tpu_custom_call.1}
  #allocation0 [shape = 'u32[]', space=smem, size = 0x4, offset = 0x4, fixed_abs, tag = 'smem constant byte address 0x4 - core index']
  #allocation1 [shape = 'u32[144,128]{1,0:T(1,128)}', space=vmem, size = 0x12000, scoped, tag = 'internal scratch']
  #allocation2 [shape = 'f32[16,128]{1,0:T(8,128)}', space=vmem, size = 0x2000, scoped, tag = 'scratch operand']
  #allocation3 [shape = 'f32[16,128]{1,0:T(8,128)}', space=vmem, size = 0x2000, scoped, tag = 'scratch operand']
  %s0 = inlined_call_operand.hbm [shape: bf16[16,128], index: 0, kind: input, shape index: {}]
  %s1 = inlined_call_operand.hbm [shape: bf16[128,128], index: 1, kind: input, shape index: {}]
  %s2 = inlined_call_operand.hbm [shape: bf16[128,128], index: 2, kind: input, shape index: {}]
  %s3 = inlined_call_operand.hbm [shape: f32[16,128], index: 3, kind: output, shape index: {}]
  %s4 = sld [smem:[#allocation0]]
  $region42: #{tpu_custom_call.1} parent=0
    _
  %s6 = ssub.s32 1, %s4
  %s7 = scalar_select 0, %s6, %s4
  $region1: #{tpu_custom_call.1} parent=0
    #allocation4 [shape = 'u8[4096]{0}', space=vmem, size = 0x1000, scoped, tag = 'input window, operand 0, single buffered']
    #allocation5 [shape = 's32[1]{0}', space=sflag, size = 0x4, scoped, tag = 'scoped memory for tpu_custom_call.1']
    #allocation6 [shape = 's32[1]{0}', space=sflag, size = 0x4, scoped, tag = 'scoped memory for tpu_custom_call.1']
    #allocation7 [shape = 'u8[32768]{0}', space=vmem, size = 0x8000, scoped, tag = 'input window, operand 1, single buffered']
    #allocation8 [shape = 's32[1]{0}', space=sflag, size = 0x4, scoped, tag = 'scoped memory for tpu_custom_call.1']
    #allocation9 [shape = 'u8[32768]{0}', space=vmem, size = 0x8000, scoped, tag = 'input window, operand 2, single buffered']
    #allocation10 [shape = 'u8[8192]{0}', space=vmem, size = 0x2000, scoped, tag = 'output window, operand 0, single buffered']
    %8 = vsyncpa [#allocation5], 0
    %9 = vsyncpa [#allocation8], 0
    %10 = vsyncpa [#allocation6], 0
    // Predicated region
    $region2: #{tpu_custom_call.1} parent=1 // pred_check
      _
    $region3: #{tpu_custom_call.1} parent=1 // pred_check_branch
      %12 = sbr.rel (0) target = $region5
    $region4: #{tpu_custom_call.1} parent=1 // pred_region
      %s14 = ssub.s32 128, 128
      %15 = vsyncadd [#allocation5], %s14
      %s16 = sshll.u32 [#allocation4], 4
      %s17 = int_to_ptr.vmem [resolvable:$true] %s16
      %22 = dma.hbm_to_vmem [thread:$0]  %s0, 128, %s17, [#allocation5], 64, 64, 4
    $region5: #{tpu_custom_call.1} parent=1 // pred_fallthru
      _
    // Predicated region
    $region6: #{tpu_custom_call.1} parent=1 // pred_check
      _
    $region7: #{tpu_custom_call.1} parent=1 // pred_check_branch
      %24 = sbr.rel (0) target = $region9
    $region8: #{tpu_custom_call.1} parent=1 // pred_region
      %s26 = ssub.s32 1024, 1024
      %27 = vsyncadd [#allocation8], %s26
      %s28 = sshll.u32 [#allocation7], 4
      %s29 = int_to_ptr.vmem [resolvable:$true] %s28
      %34 = dma.hbm_to_vmem [thread:$0]  %s1, 1024, %s29, [#allocation8], 64, 64, 4
    $region9: #{tpu_custom_call.1} parent=1 // pred_fallthru
      _
    // Predicated region
    $region10: #{tpu_custom_call.1} parent=1 // pred_check
      _
    $region11: #{tpu_custom_call.1} parent=1 // pred_check_branch
      %36 = sbr.rel (0) target = $region13
    $region12: #{tpu_custom_call.1} parent=1 // pred_region
      %s38 = ssub.s32 1024, 1024
      %39 = vsyncadd [#allocation8], %s38
      %s40 = sshll.u32 [#allocation9], 4
      %s41 = int_to_ptr.vmem [resolvable:$true] %s40
      %46 = dma.hbm_to_vmem [thread:$0]  %s2, 1024, %s41, [#allocation8], 64, 64, 4
    $region13: #{tpu_custom_call.1} parent=1 // pred_fallthru
      _
    // Predicated region
    $region14: #{tpu_custom_call.1} parent=1 // pred_check
      _
    $region15: #{tpu_custom_call.1} parent=1 // pred_check_branch
      %48 = sbr.rel (0) target = $region17
    $region16: #{tpu_custom_call.1} parent=1 // pred_region
      %49 = dma.done [#allocation5], 128
    $region17: #{tpu_custom_call.1} parent=1 // pred_fallthru
      _
    // Predicated region
    $region18: #{tpu_custom_call.1} parent=1 // pred_check
      _
    $region19: #{tpu_custom_call.1} parent=1 // pred_check_branch
      %51 = sbr.rel (0) target = $region21
    $region20: #{tpu_custom_call.1} parent=1 // pred_region
      %52 = dma.done [#allocation8], 1024
    $region21: #{tpu_custom_call.1} parent=1 // pred_fallthru
      _
    // Predicated region
    $region22: #{tpu_custom_call.1} parent=1 // pred_check
      _
    $region23: #{tpu_custom_call.1} parent=1 // pred_check_branch
      %54 = sbr.rel (0) target = $region25
    $region24: #{tpu_custom_call.1} parent=1 // pred_region
      %55 = dma.done [#allocation8], 1024
    $region25: #{tpu_custom_call.1} parent=1 // pred_fallthru
      _
    %p57 = scmp.eq.s32.totalorder 0, 0
    // Predicated region
    $region26: #{tpu_custom_call.1} parent=1 // pred_check
      %p58 = pneg %p57
    $region27: #{tpu_custom_call.1} parent=1 // pred_check_branch
      %60 = sbr.rel (%p58) target = $region29
    $region28: #{tpu_custom_call.1} parent=1 // pred_region
      %61 = vst [vmem:[#allocation2] sm:$0xff] 0.0
      %62 = vst [vmem:[#allocation2 + $0x8] sm:$0xff] 0.0
      %63 = vst [vmem:[#allocation3] sm:$0xff] 0.0
      %64 = vst [vmem:[#allocation3 + $0x8] sm:$0xff] 0.0
    $region29: #{tpu_custom_call.1} parent=1 // pred_fallthru
      _
    %v65 = vld [vmem:[#allocation4] sm:$0xf]
    %v66 = vld [vmem:[#allocation4 + $0x4] sm:$0xf]
    %v67 = vld [vmem:[#allocation2] sm:$0xff]
    %v68 = vld [vmem:[#allocation2 + $0x8] sm:$0xff]
    %v69 = vld [vmem:[#allocation7] sm:$0xf]
    %v70 = vld [vmem:[#allocation7 + $0x4] sm:$0xf]
    %v71 = vld [vmem:[#allocation7 + $0x8] sm:$0xf]
    %v72 = vld [vmem:[#allocation7 + $0xc] sm:$0xf]
    %v73 = vld [vmem:[#allocation7 + $0x10] sm:$0xf]
    %v74 = vld [vmem:[#allocation7 + $0x14] sm:$0xf]
    %v75 = vld [vmem:[#allocation7 + $0x18] sm:$0xf]
    %v76 = vld [vmem:[#allocation7 + $0x1c] sm:$0xf]
    %v77 = vld [vmem:[#allocation7 + $0x20] sm:$0xf]
    %v78 = vld [vmem:[#allocation7 + $0x24] sm:$0xf]
    %v79 = vld [vmem:[#allocation7 + $0x28] sm:$0xf]
    %v80 = vld [vmem:[#allocation7 + $0x2c] sm:$0xf]
    %v81 = vld [vmem:[#allocation7 + $0x30] sm:$0xf]
    %v82 = vld [vmem:[#allocation7 + $0x34] sm:$0xf]
    %v83 = vld [vmem:[#allocation7 + $0x38] sm:$0xf]
    %v84 = vld [vmem:[#allocation7 + $0x3c] sm:$0xf]
    %v87 = vunpack.c.l.b16 %v65
    %v88 = vunpack.c.l.b16 %v66
    %v89 = vpack.c.b16 %v88, %v87
    %v107 = vunpack.c.l.b16 %v69
    %v108 = vunpack.c.l.b16 %v70
    %v109 = vunpack.c.l.b16 %v71
    %v110 = vunpack.c.l.b16 %v72
    %v111 = vunpack.c.l.b16 %v73
    %v112 = vunpack.c.l.b16 %v74
    %v113 = vunpack.c.l.b16 %v75
    %v114 = vunpack.c.l.b16 %v76
    %v115 = vunpack.c.l.b16 %v77
    %v116 = vunpack.c.l.b16 %v78
    %v117 = vunpack.c.l.b16 %v79
    %v118 = vunpack.c.l.b16 %v80
    %v119 = vunpack.c.l.b16 %v81
    %v120 = vunpack.c.l.b16 %v82
    %v121 = vunpack.c.l.b16 %v83
    %v122 = vunpack.c.l.b16 %v84
    %v123 = vpack.c.b16 %v108, %v107
    %v124 = vpack.c.b16 %v110, %v109
    %v125 = vpack.c.b16 %v112, %v111
    %v126 = vpack.c.b16 %v114, %v113
    %v127 = vpack.c.b16 %v116, %v115
    %v128 = vpack.c.b16 %v118, %v117
    %v129 = vpack.c.b16 %v120, %v119
    %v130 = vpack.c.b16 %v122, %v121
    %139 = vmatprep.subr.bf16.mxu0 0
    %140 = vmatpush1.bf16.msra.mxu0 %v123
    %141 = vmatprep.subr.bf16.mxu0 0
    %142 = vmatpush1.bf16.msra.mxu0 %v124
    %143 = vmatprep.subr.bf16.mxu0 0
    %144 = vmatpush1.bf16.msra.mxu0 %v125
    %145 = vmatprep.subr.bf16.mxu0 0
    %146 = vmatpush1.bf16.msra.mxu0 %v126
    %147 = vmatprep.subr.bf16.mxu0 0
    %148 = vmatpush1.bf16.msra.mxu0 %v127
    %149 = vmatprep.subr.bf16.mxu0 0
    %150 = vmatpush1.bf16.msra.mxu0 %v128
    %151 = vmatprep.subr.bf16.mxu0 0
    %152 = vmatpush1.bf16.msra.mxu0 %v129
    %153 = vmatprep.subr.bf16.mxu0 0
    %154 = vmatpush1.bf16.msra.mxu0 %v130
    %155 = vmatprep.subr.bf16.mxu0 0
    %156 = vmatpush1.bf16.msra.mxu0 0
    %157 = vmatprep.subr.bf16.mxu0 0
    %158 = vmatpush1.bf16.msra.mxu0 0
    %159 = vmatprep.subr.bf16.mxu0 0
    %160 = vmatpush1.bf16.msra.mxu0 0
    %161 = vmatprep.subr.bf16.mxu0 0
    %162 = vmatpush1.bf16.msra.mxu0 0
    %163 = vmatprep.subr.bf16.mxu0 0
    %164 = vmatpush1.bf16.msra.mxu0 0
    %165 = vmatprep.subr.bf16.mxu0 0
    %166 = vmatpush1.bf16.msra.mxu0 0
    %167 = vmatprep.subr.bf16.mxu0 0
    %168 = vmatpush1.bf16.msra.mxu0 0
    %169 = vmatprep.subr.bf16.mxu0 0
    %170 = vmatpush1.bf16.msra.mxu0 0
    %171 = vmatprep.mubr.bf16.mxu0 0
    %172 = vmatmul.mubr.bf16.gmra.mrb[0].mxu0 %v89
    %v173 = vpop.f32.mrb[0].mxu0
    %v174 = vadd.f32 0.0, %v173
    %v175 = vpop.f32.mrb[0].mxu0
    %v176 = vpop.f32.mrb[0].mxu0
    %v177 = vadd.f32 0.0, %v176
    %v178 = vpop.f32.mrb[0].mxu0
    %179 = vdwg.mxu0
    %v180 = vadd.f32 %v67, %v174
    %v181 = vadd.f32 %v68, %v177
    %182 = vst [vmem:[#allocation2] sm:$0xff] %v180
    %183 = vst [vmem:[#allocation2 + $0x8] sm:$0xff] %v181
    %v184 = vld [vmem:[#allocation3] sm:$0xff]
    %v185 = vld [vmem:[#allocation3 + $0x8] sm:$0xff]
    %v186 = vld [vmem:[#allocation9] sm:$0xf]
    %v187 = vld [vmem:[#allocation9 + $0x4] sm:$0xf]
    %v188 = vld [vmem:[#allocation9 + $0x8] sm:$0xf]
    %v189 = vld [vmem:[#allocation9 + $0xc] sm:$0xf]
    %v190 = vld [vmem:[#allocation9 + $0x10] sm:$0xf]
    %v191 = vld [vmem:[#allocation9 + $0x14] sm:$0xf]
    %v192 = vld [vmem:[#allocation9 + $0x18] sm:$0xf]
    %v193 = vld [vmem:[#allocation9 + $0x1c] sm:$0xf]
    %v194 = vld [vmem:[#allocation9 + $0x20] sm:$0xf]
    %v195 = vld [vmem:[#allocation9 + $0x24] sm:$0xf]
    %v196 = vld [vmem:[#allocation9 + $0x28] sm:$0xf]
    %v197 = vld [vmem:[#allocation9 + $0x2c] sm:$0xf]
    %v198 = vld [vmem:[#allocation9 + $0x30] sm:$0xf]
    %v199 = vld [vmem:[#allocation9 + $0x34] sm:$0xf]
    %v200 = vld [vmem:[#allocation9 + $0x38] sm:$0xf]
    %v201 = vld [vmem:[#allocation9 + $0x3c] sm:$0xf]
    %v218 = vunpack.c.l.b16 %v186
    %v219 = vunpack.c.l.b16 %v187
    %v220 = vunpack.c.l.b16 %v188
    %v221 = vunpack.c.l.b16 %v189
    %v222 = vunpack.c.l.b16 %v190
    %v223 = vunpack.c.l.b16 %v191
    %v224 = vunpack.c.l.b16 %v192
    %v225 = vunpack.c.l.b16 %v193
    %v226 = vunpack.c.l.b16 %v194
    %v227 = vunpack.c.l.b16 %v195
    %v228 = vunpack.c.l.b16 %v196
    %v229 = vunpack.c.l.b16 %v197
    %v230 = vunpack.c.l.b16 %v198
    %v231 = vunpack.c.l.b16 %v199
    %v232 = vunpack.c.l.b16 %v200
    %v233 = vunpack.c.l.b16 %v201
    %v234 = vpack.c.b16 %v219, %v218
    %v235 = vpack.c.b16 %v221, %v220
    %v236 = vpack.c.b16 %v223, %v222
    %v237 = vpack.c.b16 %v225, %v224
    %v238 = vpack.c.b16 %v227, %v226
    %v239 = vpack.c.b16 %v229, %v228
    %v240 = vpack.c.b16 %v231, %v230
    %v241 = vpack.c.b16 %v233, %v232
    %250 = vmatprep.subr.bf16.mxu0 0
    %251 = vmatpush1.bf16.msra.mxu0 %v234
    %252 = vmatprep.subr.bf16.mxu0 0
    %253 = vmatpush1.bf16.msra.mxu0 %v235
    %254 = vmatprep.subr.bf16.mxu0 0
    %255 = vmatpush1.bf16.msra.mxu0 %v236
    %256 = vmatprep.subr.bf16.mxu0 0
    %257 = vmatpush1.bf16.msra.mxu0 %v237
    %258 = vmatprep.subr.bf16.mxu0 0
    %259 = vmatpush1.bf16.msra.mxu0 %v238
    %260 = vmatprep.subr.bf16.mxu0 0
    %261 = vmatpush1.bf16.msra.mxu0 %v239
    %262 = vmatprep.subr.bf16.mxu0 0
    %263 = vmatpush1.bf16.msra.mxu0 %v240
    %264 = vmatprep.subr.bf16.mxu0 0
    %265 = vmatpush1.bf16.msra.mxu0 %v241
    %266 = vmatprep.subr.bf16.mxu0 0
    %267 = vmatpush1.bf16.msra.mxu0 0
    %268 = vmatprep.subr.bf16.mxu0 0
    %269 = vmatpush1.bf16.msra.mxu0 0
    %270 = vmatprep.subr.bf16.mxu0 0
    %271 = vmatpush1.bf16.msra.mxu0 0
    %272 = vmatprep.subr.bf16.mxu0 0
    %273 = vmatpush1.bf16.msra.mxu0 0
    %274 = vmatprep.subr.bf16.mxu0 0
    %275 = vmatpush1.bf16.msra.mxu0 0
    %276 = vmatprep.subr.bf16.mxu0 0
    %277 = vmatpush1.bf16.msra.mxu0 0
    %278 = vmatprep.subr.bf16.mxu0 0
    %279 = vmatpush1.bf16.msra.mxu0 0
    %280 = vmatprep.subr.bf16.mxu0 0
    %281 = vmatpush1.bf16.msra.mxu0 0
    %282 = vmatprep.mubr.bf16.mxu0 0
    %283 = vmatmul.mubr.bf16.gmra.mrb[0].mxu0 %v89
    %v284 = vpop.f32.mrb[0].mxu0
    %v285 = vadd.f32 0.0, %v284
    %v286 = vpop.f32.mrb[0].mxu0
    %v287 = vpop.f32.mrb[0].mxu0
    %v288 = vadd.f32 0.0, %v287
    %v289 = vpop.f32.mrb[0].mxu0
    %290 = vdwg.mxu0
    %v291 = vadd.f32 %v184, %v285
    %v292 = vadd.f32 %v185, %v288
    %293 = vst [vmem:[#allocation3] sm:$0xff] %v291
    %294 = vst [vmem:[#allocation3 + $0x8] sm:$0xff] %v292
    // Predicated region
    $region30: #{tpu_custom_call.1} parent=1 // pred_check
      %p295 = pneg %p57
    $region31: #{tpu_custom_call.1} parent=1 // pred_check_branch
      %297 = sbr.rel (%p295) target = $region33
    $region32: #{tpu_custom_call.1} parent=1 // pred_region
      %v298 = vld [vmem:[#allocation2] sm:$0xff]
      %v299 = vld [vmem:[#allocation2 + $0x8] sm:$0xff]
      %v300 = vld [vmem:[#allocation3] sm:$0xff]
      %v301 = vld [vmem:[#allocation3 + $0x8] sm:$0xff]
      %v302 = vsub.f32 %v298, %v301
      %303 = vst [vmem:[#allocation10] sm:$0xff] %v302
      %v304 = vadd.f32 %v300, %v299
      %305 = vst [vmem:[#allocation10 + $0x8] sm:$0xff] %v304
    $region33: #{tpu_custom_call.1} parent=1 // pred_fallthru
      _
    // Predicated region
    $region34: #{tpu_custom_call.1} parent=1 // pred_check
      _
    $region35: #{tpu_custom_call.1} parent=1 // pred_check_branch
      %307 = sbr.rel (0) target = $region37
    $region36: #{tpu_custom_call.1} parent=1 // pred_region
      %s309 = ssub.s32 256, 256
      %310 = vsyncadd [#allocation6], %s309
      %s311 = sshll.u32 [#allocation10], 4
      %s312 = int_to_ptr.vmem [resolvable:$true] %s311
      %317 = dma.vmem_to_hbm [thread:$0]  %s312, 256, %s3, [#allocation6], 128, 128, 8
    $region37: #{tpu_custom_call.1} parent=1 // pred_fallthru
      _
    // Predicated region
    $region38: #{tpu_custom_call.1} parent=1 // pred_check
      _
    $region39: #{tpu_custom_call.1} parent=1 // pred_check_branch
      %319 = sbr.rel (0) target = $region41
    $region40: #{tpu_custom_call.1} parent=1 // pred_region
      %320 = dma.done [#allocation6], 256
    $region41: #{tpu_custom_call.1} parent=1 // pred_fallthru
      _
    %321 = vsyncpa [#allocation5], 1
    %322 = vsyncpa [#allocation8], 1
    %323 = vsyncpa [#allocation6], 1

</llo_original>
